<compile_context>
chip_gen: v6e
topology: v6e:2x2x1
jax: 0.10.0
libtpu: 0.0.40
codegen_flags: <defaults>
</compile_context>

<pallas_src>
import math

import jax
import jax.numpy as jnp
from jax.experimental import pallas as pl
from jax.experimental.pallas import tpu as pltpu


def make_sin_pe(max_len: int, d_model: int) -> jnp.ndarray:
    """Replicates PositionalEncoding.__init__ buffer `pe` (squeezed to [max_len, d_model])."""
    r = d_model % 2
    dm = d_model + r
    position = jnp.arange(max_len, dtype=jnp.float32)[:, None]
    div_term = jnp.exp(
        jnp.arange(0, dm, 2, dtype=jnp.float32) * (-math.log(10000.0) / dm)
    )
    pe = jnp.zeros((max_len, dm), dtype=jnp.float32)
    pe = pe.at[:, 0::2].set(jnp.sin(position * div_term))
    pe = pe.at[:, 1::2].set(jnp.cos(position * div_term))
    return pe[:, :d_model]


def _round_up(x: int, m: int) -> int:
    return ((x + m - 1) // m) * m


def _embed_kernel(ids_ref, pos_ids_ref, word_ref, pos_ref, out_ref):
    # ids_ref / pos_ids_ref : (TM, 1) int32 row chunks
    # word_ref              : (V, D) full, VMEM-resident word-embedding table
    # pos_ref               : (L, D) full, VMEM-resident positional table (rows 0..S-1)
    # out_ref               : (TM, D) output slab
    tm = out_ref.shape[0]
    vocab = word_ref.shape[0]
    plen = pos_ref.shape[0]

    ids = ids_ref[...]        # (TM, 1)
    pids = pos_ids_ref[...]   # (TM, 1)

    # In-kernel gather as one-hot @ table on the MXU (tables are resident in VMEM).
    word_oh = (ids == jax.lax.broadcasted_iota(jnp.int32, (tm, vocab), 1)).astype(
        jnp.float32
    )
    pos_oh = (pids == jax.lax.broadcasted_iota(jnp.int32, (tm, plen), 1)).astype(
        jnp.float32
    )

    gathered = jnp.dot(word_oh, word_ref[...], preferred_element_type=jnp.float32)
    pos_rows = jnp.dot(pos_oh, pos_ref[...], preferred_element_type=jnp.float32)

    out_ref[...] = (gathered + pos_rows).astype(out_ref.dtype)


def full_embedding_forward(token_ids, word_emb, pos_table, *, block_rows=256):
    """FullEmbedding.forward: word(x) + positional(rows 0..S-1); dropout p=0 (identity).

    token_ids: [S, B] int32
    word_emb : [num_tokens, D] float32
    pos_table: [max_len, D] float32 (sinusoidal buffer or learned positional table)
    returns  : [S, B, D] float32
    """
    S, B = token_ids.shape
    V, D = word_emb.shape
    N = S * B

    # Flat row-major ids; flat row n -> (seq = n // B, batch = n % B).
    flat_ids = token_ids.reshape(-1).astype(jnp.int32)
    pos_ids = jnp.repeat(jnp.arange(S, dtype=jnp.int32), B)

    # Rows per grid step: multiple of 8 (sublane-dense), capped at block_rows.
    TM = min(block_rows, _round_up(N, 8))
    N_pad = _round_up(N, TM)
    pad = N_pad - N
    if pad:
        flat_ids = jnp.pad(flat_ids, (0, pad))   # pad with id 0 (valid row, sliced off later)
        pos_ids = jnp.pad(pos_ids, (0, pad))
    flat_ids = flat_ids.reshape(N_pad, 1)
    pos_ids = pos_ids.reshape(N_pad, 1)

    # Only positions 0..S-1 are ever used.
    pos_used = pos_table[:S]
    L = pos_used.shape[0]

    grid = (N_pad // TM,)

    # VMEM budget: resident tables + double-buffered id/out blocks (+ headroom),
    # capped at 32 MiB so the limit is safe on v7x's smaller VMEM as well.
    vmem_needed = (
        4 * (V * D + L * D)          # resident tables
        + 2 * (4 * TM * D)           # double-buffered output block
        + 2 * 2 * (4 * TM)           # double-buffered id / pos-id blocks
        + (4 << 20)                  # headroom for internal scratch / one-hot temps
    )
    vmem_limit = int(min(max(vmem_needed, 8 << 20), 32 << 20))

    cost = pl.CostEstimate(
        flops=2 * N_pad * D,
        transcendentals=0,
        bytes_accessed=4 * (N_pad * D + V * D + L * D + 2 * N_pad),
    )

    out_flat = pl.pallas_call(
        _embed_kernel,
        out_shape=jax.ShapeDtypeStruct((N_pad, D), word_emb.dtype),
        grid_spec=pltpu.PrefetchScalarGridSpec(
            num_scalar_prefetch=0,
            grid=grid,
            in_specs=[
                pl.BlockSpec((TM, 1), lambda i: (i, 0)),   # token ids chunk
                pl.BlockSpec((TM, 1), lambda i: (i, 0)),   # position ids chunk
                pl.BlockSpec((V, D), lambda i: (0, 0)),    # word table, resident
                pl.BlockSpec((L, D), lambda i: (0, 0)),    # pos table, resident
            ],
            out_specs=pl.BlockSpec((TM, D), lambda i: (i, 0)),
        ),
        compiler_params=pltpu.CompilerParams(
            dimension_semantics=("parallel",),
            vmem_limit_bytes=vmem_limit,
        ),
        cost_estimate=cost,
    )(flat_ids, pos_ids, word_emb, pos_used)

    return out_flat[:N].reshape(S, B, D)


def reference_forward(token_ids, word_emb, pos_table):
    S = token_ids.shape[0]
    res = word_emb[token_ids]                      # [S, B, D]
    return res + pos_table[:S][:, None, :]         # broadcast over batch


if __name__ == "__main__":
    d_model = 32
    num_tokens = 100
    max_len = 64
    S, B = 8, 2

    key = jax.random.PRNGKey(0)
    k_word, k_posemb, k_ids = jax.random.split(key, 3)

    # Deterministic "parameter" init (nn.Embedding default is N(0, 1)).
    word_emb = jax.random.normal(k_word, (num_tokens, d_model), dtype=jnp.float32)
    token_ids = jax.random.randint(k_ids, (S, B), 0, num_tokens, dtype=jnp.int32)

    ok = True

    # positional_encoding_type = 'sin'  (PositionalEncoding)
    pe_sin = make_sin_pe(max_len, d_model)
    out_sin = full_embedding_forward(token_ids, word_emb, pe_sin)
    jax.block_until_ready(out_sin)
    ref_sin = reference_forward(token_ids, word_emb, pe_sin)
    ok &= bool(jnp.allclose(out_sin, ref_sin, atol=1e-5, rtol=1e-5))

    # positional_encoding_type = 'embed'  (PositionalEmbedding, learned table)
    pe_embed = jax.random.normal(k_posemb, (max_len, d_model), dtype=jnp.float32)
    out_emb = full_embedding_forward(token_ids, word_emb, pe_embed)
    jax.block_until_ready(out_emb)
    ref_emb = reference_forward(token_ids, word_emb, pe_embed)
    ok &= bool(jnp.allclose(out_emb, ref_emb, atol=1e-5, rtol=1e-5))

    # Dropout p=positional_dropout is applied in eval-style (p=0.0 here) -> identity.
    if ok:
        print("KERNEL_OK")
    else:
        raise SystemExit("mismatch vs reference")
</pallas_src>

<mosaic_0001>
module attributes {stable_mosaic.version = 11 : i64} {
  func.func @_embed_kernel(%arg0: i32, %arg1: memref<16x1xi32, #tpu.memory_space<vmem>>, %arg2: memref<16x1xi32, #tpu.memory_space<vmem>>, %arg3: memref<100x32xf32, #tpu.memory_space<vmem>>, %arg4: memref<8x32xf32, #tpu.memory_space<vmem>>, %arg5: memref<16x32xf32, #tpu.memory_space<vmem>>) attributes {dimension_semantics = [#tpu.dimension_semantics<parallel>], iteration_bounds = array<i64: 1>, scalar_prefetch = 0 : i64, scratch_operands = 0 : i64, tpu.core_type = #tpu.core_type<tc>, window_params = [{transform_indices = @transform_0, window_bounds = array<i64: 16, 1>}, {transform_indices = @transform_1, window_bounds = array<i64: 16, 1>}, {pipeline_mode = #tpu.pipeline_mode<synchronous>, transform_indices = @transform_2, window_bounds = array<i64: 100, 32>}, {pipeline_mode = #tpu.pipeline_mode<synchronous>, transform_indices = @transform_3, window_bounds = array<i64: 8, 32>}, {transform_indices = @transform_4, window_bounds = array<i64: 16, 32>}]} {
    %c0 = arith.constant 0 : index
    %c0_0 = arith.constant 0 : index
    %0 = vector.load %arg1[%c0, %c0_0] : memref<16x1xi32, #tpu.memory_space<vmem>>, vector<16x1xi32>
    %c0_1 = arith.constant 0 : index
    %c0_2 = arith.constant 0 : index
    %1 = vector.load %arg2[%c0_1, %c0_2] : memref<16x1xi32, #tpu.memory_space<vmem>>, vector<16x1xi32>
    %2 = tpu.iota {dimensions = array<i32: 1>} : vector<16x100xi32>
    %3 = vector.broadcast %0 : vector<16x1xi32> to vector<16x100xi32>
    %4 = arith.cmpi eq, %3, %2 : vector<16x100xi32>
    %5 = arith.extui %4 : vector<16x100xi1> to vector<16x100xi32>
    %6 = arith.sitofp %5 : vector<16x100xi32> to vector<16x100xf32>
    %7 = tpu.iota {dimensions = array<i32: 1>} : vector<16x8xi32>
    %8 = vector.broadcast %1 : vector<16x1xi32> to vector<16x8xi32>
    %9 = arith.cmpi eq, %8, %7 : vector<16x8xi32>
    %10 = arith.extui %9 : vector<16x8xi1> to vector<16x8xi32>
    %11 = arith.sitofp %10 : vector<16x8xi32> to vector<16x8xf32>
    %c0_3 = arith.constant 0 : index
    %c0_4 = arith.constant 0 : index
    %12 = vector.load %arg3[%c0_3, %c0_4] : memref<100x32xf32, #tpu.memory_space<vmem>>, vector<100x32xf32>
    %cst = arith.constant dense<0.000000e+00> : vector<16x32xf32>
    %13 = tpu.matmul %6, %12, %cst {dimension_numbers = #tpu.dot_dimension_numbers<[1], [0], [0], [1], [0, 0, 1, 1], [], []>} : vector<16x100xf32>, vector<100x32xf32>, vector<16x32xf32> -> vector<16x32xf32>
    %c0_5 = arith.constant 0 : index
    %c0_6 = arith.constant 0 : index
    %14 = vector.load %arg4[%c0_5, %c0_6] : memref<8x32xf32, #tpu.memory_space<vmem>>, vector<8x32xf32>
    %cst_7 = arith.constant dense<0.000000e+00> : vector<16x32xf32>
    %15 = tpu.matmul %11, %14, %cst_7 {dimension_numbers = #tpu.dot_dimension_numbers<[1], [0], [0], [1], [0, 0, 1, 1], [], []>} : vector<16x8xf32>, vector<8x32xf32>, vector<16x32xf32> -> vector<16x32xf32>
    %16 = arith.addf %13, %15 : vector<16x32xf32>
    %c0_8 = arith.constant 0 : index
    %c0_9 = arith.constant 0 : index
    %17 = vector.load %arg5[%c0_8, %c0_9] : memref<16x32xf32, #tpu.memory_space<vmem>>, vector<16x32xf32>
    tpu.vector_store %arg5[%c0_8, %c0_9], %16 {strides = array<i32>} : memref<16x32xf32, #tpu.memory_space<vmem>>, vector<16x32xf32>,
    return
  }
  func.func @transform_0(%arg0: i32) -> (i32, i32) {
    %c0_i32 = arith.constant 0 : i32
    %c0_i32_0 = arith.constant 0 : i32
    return %arg0, %c0_i32 : i32, i32
  }
  func.func @transform_1(%arg0: i32) -> (i32, i32) {
    %c0_i32 = arith.constant 0 : i32
    %c0_i32_0 = arith.constant 0 : i32
    return %arg0, %c0_i32 : i32, i32
  }
  func.func @transform_2(%arg0: i32) -> (i32, i32) {
    %c0_i32 = arith.constant 0 : i32
    %c0_i32_0 = arith.constant 0 : i32
    %c0_i32_1 = arith.constant 0 : i32
    return %c0_i32, %c0_i32_0 : i32, i32
  }
  func.func @transform_3(%arg0: i32) -> (i32, i32) {
    %c0_i32 = arith.constant 0 : i32
    %c0_i32_0 = arith.constant 0 : i32
    %c0_i32_1 = arith.constant 0 : i32
    return %c0_i32, %c0_i32_0 : i32, i32
  }
  func.func @transform_4(%arg0: i32) -> (i32, i32) {
    %c0_i32 = arith.constant 0 : i32
    %c0_i32_0 = arith.constant 0 : i32
    return %arg0, %c0_i32 : i32, i32
  }
}

</mosaic_0001>

<llo_original>
// kernel: tpu_custom_call.1
$region0: #{tpu_custom_call.1}
  #allocation0 [shape = 'u32[]', space=smem, size = 0x4, offset = 0x4, fixed_abs, tag = 'smem constant byte address 0x4 - core index']
  #allocation1 [shape = 'u32[144,128]{1,0:T(1,128)}', space=vmem, size = 0x12000, scoped, tag = 'internal scratch']
  %s0 = inlined_call_operand.vmem [shape: s32[16,1], index: 0, kind: input, shape index: {}]
  %s1 = inlined_call_operand.vmem [shape: s32[16,1], index: 1, kind: input, shape index: {}]
  %s2 = inlined_call_operand.vmem [shape: f32[100,32], index: 2, kind: input, shape index: {}]
  %s3 = inlined_call_operand.vmem [shape: f32[8,32], index: 3, kind: input, shape index: {}]
  %s4 = inlined_call_operand.hbm [shape: f32[16,32], index: 4, kind: output, shape index: {}]
  %s5 = sld [smem:[#allocation0]]
  $region26: #{tpu_custom_call.1} parent=0
    _
  %s7 = ssub.s32 1, %s5
  %s8 = scalar_select 0, %s7, %s5
  $region1: #{tpu_custom_call.1} parent=0
    #allocation2 [shape = 'u8[8192]{0}', space=vmem, size = 0x2000, scoped, tag = 'output window, operand 0, single buffered']
    #allocation3 [shape = 's32[1]{0}', space=sflag, size = 0x4, scoped, tag = 'scoped memory for tpu_custom_call.1']
    %9 = vsyncpa [#allocation3], 0
    // Predicated region
    $region2: #{tpu_custom_call.1} parent=1 // pred_check
      _
    $region3: #{tpu_custom_call.1} parent=1 // pred_check_branch
      %11 = sbr.rel (0) target = $region5
    $region4: #{tpu_custom_call.1} parent=1 // pred_region
      _
    $region5: #{tpu_custom_call.1} parent=1 // pred_fallthru
      _
    // Predicated region
    $region6: #{tpu_custom_call.1} parent=1 // pred_check
      _
    $region7: #{tpu_custom_call.1} parent=1 // pred_check_branch
      %13 = sbr.rel (0) target = $region9
    $region8: #{tpu_custom_call.1} parent=1 // pred_region
      _
    $region9: #{tpu_custom_call.1} parent=1 // pred_fallthru
      _
    // Predicated region
    $region10: #{tpu_custom_call.1} parent=1 // pred_check
      _
    $region11: #{tpu_custom_call.1} parent=1 // pred_check_branch
      %15 = sbr.rel (0) target = $region13
    $region12: #{tpu_custom_call.1} parent=1 // pred_region
      _
    $region13: #{tpu_custom_call.1} parent=1 // pred_fallthru
      _
    // Predicated region
    $region14: #{tpu_custom_call.1} parent=1 // pred_check
      _
    $region15: #{tpu_custom_call.1} parent=1 // pred_check_branch
      %17 = sbr.rel (0) target = $region17
    $region16: #{tpu_custom_call.1} parent=1 // pred_region
      _
    $region17: #{tpu_custom_call.1} parent=1 // pred_fallthru
      _
    %v18 = vld [vmem:[%s0] sm:$0xff]
    %v19 = vld [vmem:[%s0 + $0x8] sm:$0xff]
    %v20 = vld [vmem:[%s1] sm:$0xff]
    %v21 = vld [vmem:[%s1 + $0x8] sm:$0xff]
    %v22 = vlaneseq
    %v23 = vand.u32 %v22, 127
    %24 = vset.pattern.permute.xlu0 0
    %25 = vperm.xlu0 %24, %v18
    %v26 = vpop.permute.xlu0 %25
    %27 = vset.pattern.permute.xlu0 0
    %28 = vperm.xlu0 %27, %v19
    %v29 = vpop.permute.xlu0 %28
    %vm30 = vcmp.eq.s32.totalorder %v26, %v23
    %vm31 = vcmp.eq.s32.totalorder %v29, %v23
    %v32 = vsel %vm30, 1, 0
    %v33 = vsel %vm31, 1, 0
    %v34 = vcvt.s32.f32 %v32
    %v35 = vcvt.s32.f32 %v33
    %36 = vset.pattern.permute.xlu0 0
    %37 = vperm.xlu0 %36, %v20
    %v38 = vpop.permute.xlu0 %37
    %39 = vset.pattern.permute.xlu0 0
    %40 = vperm.xlu0 %39, %v21
    %v41 = vpop.permute.xlu0 %40
    %vm42 = vcmp.eq.s32.totalorder %v38, %v23
    %vm43 = vcmp.eq.s32.totalorder %v41, %v23
    %v44 = vsel %vm42, 1, 0
    %v45 = vsel %vm43, 1, 0
    %v46 = vcvt.s32.f32 %v44
    %v47 = vcvt.s32.f32 %v45
    %v48 = vld [vmem:[%s2] sm:$0xff]
    %v49 = vld [vmem:[%s2 + $0x8] sm:$0xff]
    %v50 = vld [vmem:[%s2 + $0x10] sm:$0xff]
    %v51 = vld [vmem:[%s2 + $0x18] sm:$0xff]
    %v52 = vld [vmem:[%s2 + $0x20] sm:$0xff]
    %v53 = vld [vmem:[%s2 + $0x28] sm:$0xff]
    %v54 = vld [vmem:[%s2 + $0x30] sm:$0xff]
    %v55 = vld [vmem:[%s2 + $0x38] sm:$0xff]
    %v56 = vld [vmem:[%s2 + $0x40] sm:$0xff]
    %v57 = vld [vmem:[%s2 + $0x48] sm:$0xff]
    %v58 = vld [vmem:[%s2 + $0x50] sm:$0xff]
    %v59 = vld [vmem:[%s2 + $0x58] sm:$0xff]
    %v60 = vld [vmem:[%s2 + $0x60] sm:$0xf]
    %v61 = vld [vmem:[%s3] sm:$0xff]
    %vm62 = vcmask 64512
    %v64 = vsel %vm62, %v46, 0
    %v67 = vsel %vm62, %v47, 0
    %69 = vmatprep.subr.mxu0 0.0
    %70 = vmatpush1.msra.mxu0 0.0
    %71 = vmatprep.subr.mxu0 0.0
    %72 = vmatpush1.msra.mxu0 0.0
    %73 = vmatprep.subr.mxu0 0.0
    %74 = vmatpush1.msra.mxu0 0.0
    %75 = vmatprep.subr.mxu0 0.0
    %76 = vmatpush1.msra.mxu0 0.0
    %77 = vmatprep.subr.mxu0 0.0
    %78 = vmatpush1.msra.mxu0 0.0
    %79 = vmatprep.subr.mxu0 0.0
    %80 = vmatpush1.msra.mxu0 0.0
    %81 = vmatprep.subr.mxu0 0.0
    %82 = vmatpush1.msra.mxu0 0.0
    %83 = vmatprep.subr.mxu0 0.0
    %84 = vmatpush1.msra.mxu0 0.0
    %85 = vmatprep.subr.mxu0 0.0
    %86 = vmatpush1.msra.mxu0 0.0
    %87 = vmatprep.subr.mxu0 0.0
    %88 = vmatpush1.msra.mxu0 0.0
    %89 = vmatprep.subr.mxu0 0.0
    %90 = vmatpush1.msra.mxu0 0.0
    %91 = vmatprep.subr.mxu0 0.0
    %92 = vmatpush1.msra.mxu0 0.0
    %93 = vmatprep.subr.mxu0 0.0
    %94 = vmatpush1.msra.mxu0 0.0
    %95 = vmatprep.subr.mxu0 0.0
    %96 = vmatpush1.msra.mxu0 0.0
    %97 = vmatprep.subr.mxu0 0.0
    %98 = vmatpush1.msra.mxu0 0.0
    %99 = vmatprep.subr.mxu0 0.0
    %100 = vmatpush1.msra.mxu0 %v61
    %101 = vmatprep.subr.mxu0 0.0
    %102 = vmatpush2.msra.mxu0 0.0
    %103 = vmatprep.subr.mxu0 0.0
    %104 = vmatpush2.msra.mxu0 0.0
    %105 = vmatprep.subr.mxu0 0.0
    %106 = vmatpush2.msra.mxu0 0.0
    %107 = vmatprep.subr.mxu0 0.0
    %108 = vmatpush2.msra.mxu0 0.0
    %109 = vmatprep.subr.mxu0 0.0
    %110 = vmatpush2.msra.mxu0 0.0
    %111 = vmatprep.subr.mxu0 0.0
    %112 = vmatpush2.msra.mxu0 0.0
    %113 = vmatprep.subr.mxu0 0.0
    %114 = vmatpush2.msra.mxu0 0.0
    %115 = vmatprep.subr.mxu0 0.0
    %116 = vmatpush2.msra.mxu0 0.0
    %117 = vmatprep.subr.mxu0 0.0
    %118 = vmatpush2.msra.mxu0 0.0
    %119 = vmatprep.subr.mxu0 0.0
    %120 = vmatpush2.msra.mxu0 0.0
    %121 = vmatprep.subr.mxu0 0.0
    %122 = vmatpush2.msra.mxu0 0.0
    %123 = vmatprep.subr.mxu0 0.0
    %124 = vmatpush2.msra.mxu0 0.0
    %125 = vmatprep.subr.mxu0 0.0
    %126 = vmatpush2.msra.mxu0 0.0
    %127 = vmatprep.subr.mxu0 0.0
    %128 = vmatpush2.msra.mxu0 0.0
    %129 = vmatprep.subr.mxu0 0.0
    %130 = vmatpush2.msra.mxu0 0.0
    %131 = vmatprep.subr.mxu0 0.0
    %132 = vmatpush2.msra.mxu0 0.0
    %133 = vmatprep.mubr.f32.mxu0 0.0
    %134 = vmatmul.mubr.f32.gmra.mxu0 %v64
    %v135 = vpop.f32.mrf.mxu0
    %v136 = vadd.f32 0.0, %v135
    %v137 = vpop.f32.mrf.mxu0
    %138 = vmatprep.mubr.f32.mxu0 0.0
    %139 = vmatmul.mubr.f32.gmra.mxu0 %v67
    %v140 = vpop.f32.mrf.mxu0
    %v141 = vadd.f32 0.0, %v140
    %v142 = vpop.f32.mrf.mxu0
    %143 = vdwg.mxu0
    %vm144 = vcmask 818176
    %v146 = vsel %vm144, %v34, 0
    %v149 = vsel %vm144, %v35, 0
    %vm151 = vcmask 1043456
    %v153 = vsel %vm151, %v60, 0
    %155 = vmatprep.subr.mxu0 0.0
    %156 = vmatpush1.msra.mxu0 0.0
    %157 = vmatprep.subr.mxu0 0.0
    %158 = vmatpush1.msra.mxu0 0.0
    %159 = vmatprep.subr.mxu0 0.0
    %160 = vmatpush1.msra.mxu0 0.0
    %161 = vmatprep.subr.mxu0 0.0
    %162 = vmatpush1.msra.mxu0 %v153
    %163 = vmatprep.subr.mxu0 0.0
    %164 = vmatpush1.msra.mxu0 %v59
    %165 = vmatprep.subr.mxu0 0.0
    %166 = vmatpush1.msra.mxu0 %v58
    %167 = vmatprep.subr.mxu0 0.0
    %168 = vmatpush1.msra.mxu0 %v57
    %169 = vmatprep.subr.mxu0 0.0
    %170 = vmatpush1.msra.mxu0 %v56
    %171 = vmatprep.subr.mxu0 0.0
    %172 = vmatpush1.msra.mxu0 %v55
    %173 = vmatprep.subr.mxu0 0.0
    %174 = vmatpush1.msra.mxu0 %v54
    %175 = vmatprep.subr.mxu0 0.0
    %176 = vmatpush1.msra.mxu0 %v53
    %177 = vmatprep.subr.mxu0 0.0
    %178 = vmatpush1.msra.mxu0 %v52
    %179 = vmatprep.subr.mxu0 0.0
    %180 = vmatpush1.msra.mxu0 %v51
    %181 = vmatprep.subr.mxu0 0.0
    %182 = vmatpush1.msra.mxu0 %v50
    %183 = vmatprep.subr.mxu0 0.0
    %184 = vmatpush1.msra.mxu0 %v49
    %185 = vmatprep.subr.mxu0 0.0
    %186 = vmatpush1.msra.mxu0 %v48
    %187 = vmatprep.subr.mxu0 0.0
    %188 = vmatpush2.msra.mxu0 0.0
    %189 = vmatprep.subr.mxu0 0.0
    %190 = vmatpush2.msra.mxu0 0.0
    %191 = vmatprep.subr.mxu0 0.0
    %192 = vmatpush2.msra.mxu0 0.0
    %193 = vmatprep.subr.mxu0 0.0
    %194 = vmatpush2.msra.mxu0 0.0
    %195 = vmatprep.subr.mxu0 0.0
    %196 = vmatpush2.msra.mxu0 0.0
    %197 = vmatprep.subr.mxu0 0.0
    %198 = vmatpush2.msra.mxu0 0.0
    %199 = vmatprep.subr.mxu0 0.0
    %200 = vmatpush2.msra.mxu0 0.0
    %201 = vmatprep.subr.mxu0 0.0
    %202 = vmatpush2.msra.mxu0 0.0
    %203 = vmatprep.subr.mxu0 0.0
    %204 = vmatpush2.msra.mxu0 0.0
    %205 = vmatprep.subr.mxu0 0.0
    %206 = vmatpush2.msra.mxu0 0.0
    %207 = vmatprep.subr.mxu0 0.0
    %208 = vmatpush2.msra.mxu0 0.0
    %209 = vmatprep.subr.mxu0 0.0
    %210 = vmatpush2.msra.mxu0 0.0
    %211 = vmatprep.subr.mxu0 0.0
    %212 = vmatpush2.msra.mxu0 0.0
    %213 = vmatprep.subr.mxu0 0.0
    %214 = vmatpush2.msra.mxu0 0.0
    %215 = vmatprep.subr.mxu0 0.0
    %216 = vmatpush2.msra.mxu0 0.0
    %217 = vmatprep.subr.mxu0 0.0
    %218 = vmatpush2.msra.mxu0 0.0
    %219 = vmatprep.mubr.f32.mxu0 0.0
    %220 = vmatmul.mubr.f32.gmra.mxu0 %v146
    %v221 = vpop.f32.mrf.mxu0
    %v222 = vadd.f32 %v136, %v221
    %v223 = vpop.f32.mrf.mxu0
    %224 = vmatprep.mubr.f32.mxu0 0.0
    %225 = vmatmul.mubr.f32.gmra.mxu0 %v149
    %v226 = vpop.f32.mrf.mxu0
    %v227 = vadd.f32 %v141, %v226
    %v228 = vpop.f32.mrf.mxu0
    %229 = vdwg.mxu0
    %vm230 = vcmask 261120
    %231 = vst.msk [vmem:[#allocation2] sm:$0xff] %vm230, %v222
    %232 = vst.msk [vmem:[#allocation2 + $0x8] sm:$0xff] %vm230, %v227
    // Predicated region
    $region18: #{tpu_custom_call.1} parent=1 // pred_check
      _
    $region19: #{tpu_custom_call.1} parent=1 // pred_check_branch
      %234 = sbr.rel (0) target = $region21
    $region20: #{tpu_custom_call.1} parent=1 // pred_region
      %s236 = ssub.s32 256, 256
      %237 = vsyncadd [#allocation3], %s236
      %s238 = sshll.u32 [#allocation2], 4
      %s239 = int_to_ptr.vmem [resolvable:$true] %s238
      %244 = dma.vmem_to_hbm [thread:$0]  %s239, 256, %s4, [#allocation3], 128, 128, 8
    $region21: #{tpu_custom_call.1} parent=1 // pred_fallthru
      _
    // Predicated region
    $region22: #{tpu_custom_call.1} parent=1 // pred_check
      _
    $region23: #{tpu_custom_call.1} parent=1 // pred_check_branch
      %246 = sbr.rel (0) target = $region25
    $region24: #{tpu_custom_call.1} parent=1 // pred_region
      %247 = dma.done [#allocation3], 256
    $region25: #{tpu_custom_call.1} parent=1 // pred_fallthru
      _
    %248 = vsyncpa [#allocation3], 1

</llo_original>
